<compile_context>
chip_gen: v5e
topology: v5e:2x2
jax: 0.10.0
libtpu: 0.0.40
codegen_flags: <defaults>
</compile_context>

<pallas_src>
import functools

import numpy as np
import jax
import jax.numpy as jnp
from jax.experimental import pallas as pl
from jax.experimental.pallas import tpu as pltpu


# --------------------------- fused Pallas kernel -----------------------------
def _gumbel_quantiser_kernel(z_ref, g_ref, wi_ref, bi_ref, cb_ref, wo_ref, bo_ref,
                             out_ref, idx_ref, div_ref,
                             *, inv_tau, klw, pages, hard):
    z = z_ref[...]                                                   # (tn, F)

    # ---- input projection: logits over codes ----------------------------------
    logits = jnp.dot(z, wi_ref[...], preferred_element_type=jnp.float32) + bi_ref[...]

    # ---- gumbel-softmax over the codes dim (noise precomputed, passed in) -----
    y = (logits + g_ref[...]) * inv_tau
    y = y - jnp.max(y, axis=-1, keepdims=True)
    ey = jnp.exp(y)
    y_soft = ey * pl.reciprocal(jnp.sum(ey, axis=-1, keepdims=True), approx=True)
    if hard:
        # straight-through forward value == one-hot(argmax); first-max tie-break
        iota = jax.lax.broadcasted_iota(jnp.int32, y_soft.shape, 1)
        mx = jnp.max(y_soft, axis=-1, keepdims=True)
        first = jnp.min(jnp.where(y_soft >= mx, iota, jnp.int32(2 ** 30)),
                        axis=-1, keepdims=True)
        y_q = (iota == first).astype(jnp.float32)
    else:
        y_q = y_soft

    cb = cb_ref[...]                                                 # (P, C)

    # idxes = y_q @ codebook.T  (contract on the codes dim; no explicit transpose)
    idx = jax.lax.dot_general(y_q, cb, (((1,), (1,)), ((), ())),
                              preferred_element_type=jnp.float32)    # (tn, P)
    idx_ref[...] = idx

    # TODO(synk): nn.Embedding called on a float tensor is not executable in PyTorch;
    # implemented here as the soft lookup idxes @ codebook.weight (the one-hot
    # Embedding lookup generalised to soft weights).
    codes = jnp.dot(idx, cb, preferred_element_type=jnp.float32)     # (tn, C)

    # ---- KL-style divergence from softmax(logits) ------------------------------
    s = logits - jnp.max(logits, axis=-1, keepdims=True)
    es = jnp.exp(s)
    scores = es * pl.reciprocal(jnp.sum(es, axis=-1, keepdims=True), approx=True)
    div_ref[...] = klw * jnp.sum(scores * jnp.log(scores * pages + 1e-12),
                                 axis=-1, keepdims=True)             # (tn, 1)

    # ---- output projection back to features ------------------------------------
    out_ref[...] = jnp.dot(codes, wo_ref[...],
                           preferred_element_type=jnp.float32) + bo_ref[...]


def gumbel_quantiser_forward(z, params, noise, *, temperature=1.0, klw=5e-4,
                             hard=True, row_blocks=2):
    """z: (..., features). Returns (codes(..., features), divergence scalar, idxes(..., pages))."""
    lead = z.shape[:-1]
    F = z.shape[-1]
    z2 = z.reshape(-1, F).astype(jnp.float32)
    N = z2.shape[0]
    g2 = noise.reshape(N, -1).astype(jnp.float32)

    wi, bi = params['w_in'], params['b_in']            # (F, C), (1, C)   pre-transposed
    cb = params['codebook']                            # (P, C)
    wo, bo = params['w_out'], params['b_out']          # (C, F), (1, F)   pre-transposed
    C = wi.shape[1]
    P = cb.shape[0]

    # parallel row-block axis (lets v7x shard its two TensorCores)
    if N % (8 * row_blocks) != 0:
        row_blocks = 1
    tn = N // row_blocks

    kern = functools.partial(_gumbel_quantiser_kernel,
                             inv_tau=1.0 / temperature, klw=klw,
                             pages=float(P), hard=hard)

    full = lambda shape: pl.BlockSpec(shape, lambda i: (0,) * len(shape))
    row = lambda d: pl.BlockSpec((tn, d), lambda i: (i, 0))

    out, idx, div = pl.pallas_call(
        kern,
        out_shape=(jax.ShapeDtypeStruct((N, F), jnp.float32),
                   jax.ShapeDtypeStruct((N, P), jnp.float32),
                   jax.ShapeDtypeStruct((N, 1), jnp.float32)),
        grid=(row_blocks,),
        in_specs=[row(F),            # z rows
                  row(C),            # gumbel noise rows
                  full((F, C)),      # input Linear weight (in, out)
                  full((1, C)),      # input Linear bias
                  full((P, C)),      # codebook
                  full((C, F)),      # output Linear weight (in, out)
                  full((1, F))],     # output Linear bias
        out_specs=(row(F), row(P), row(1)),
        compiler_params=pltpu.CompilerParams(
            dimension_semantics=("parallel",),
            vmem_limit_bytes=16 * 1024 * 1024),
    )(z2, g2, wi, bi, cb, wo, bo)

    divergence = jnp.mean(div)
    # TODO(synk): PyTorch returns `idxes` as this float (N, pages) tensor (not integer
    # indices); kept as-is to match the reference forward. int64-vs-f32/int32 dtype
    # quirks of torch do not apply.
    return out.reshape(*lead, F), divergence, idx.reshape(*lead, P)


# --------------------------- pure-JAX reference -------------------------------
def gumbel_quantiser_reference(z, params, noise, *, temperature=1.0, klw=5e-4, hard=True):
    lead = z.shape[:-1]
    z2 = z.reshape(-1, z.shape[-1]).astype(jnp.float32)
    g2 = noise.reshape(z2.shape[0], -1).astype(jnp.float32)
    logits = z2 @ params['w_in'] + params['b_in']
    # TODO(synk): torch's F.softmax with no dim picks dim=0 for 3-D inputs (legacy
    # quirk); leading dims are flattened here so the softmax dim is unambiguously last.
    y = jax.nn.softmax((logits + g2) / temperature, axis=-1)
    if hard:
        y = jax.nn.one_hot(jnp.argmax(y, axis=-1), y.shape[-1], dtype=jnp.float32)
    idx = y @ params['codebook'].T
    codes = idx @ params['codebook']
    scores = jax.nn.softmax(logits, axis=-1)
    pages = params['codebook'].shape[0]
    div = klw * jnp.sum(scores * jnp.log(scores * pages + 1e-12), axis=-1)
    out = codes @ params['w_out'] + params['b_out']
    return out.reshape(*lead, -1), jnp.mean(div), idx.reshape(*lead, -1)


# ------------------------------------ main ------------------------------------
if __name__ == "__main__":
    FEATURES, CODES, PAGES = 64, 16, 64
    TEMPERATURE, KLW = 1.0, 5e-4
    B, S = 2, 64                      # B*S = 128 token rows per call (fills MXU rows)

    key = jax.random.PRNGKey(0)
    kz, kwi, kcb, kwo, kn = jax.random.split(key, 5)

    # weights stored pre-transposed in (in, out) layout (matches nn.Linear semantics)
    params = dict(
        w_in=0.02 * jax.random.normal(kwi, (FEATURES, CODES), jnp.float32),
        b_in=jnp.zeros((1, CODES), jnp.float32),
        codebook=jax.random.normal(kcb, (PAGES, CODES), jnp.float32),
        w_out=0.02 * jax.random.normal(kwo, (CODES, FEATURES), jnp.float32),
        b_out=jnp.zeros((1, FEATURES), jnp.float32),
    )
    z = jax.random.normal(kz, (B, S, FEATURES), jnp.float32)
    # Gumbel noise for F.gumbel_softmax, drawn once (deterministic wrt PRNGKey(0))
    noise = jax.random.gumbel(kn, (B, S, CODES), jnp.float32)

    fwd = jax.jit(functools.partial(gumbel_quantiser_forward,
                                    temperature=TEMPERATURE, klw=KLW, hard=True))
    codes, divergence, idxes = fwd(z, params, noise)
    jax.block_until_ready((codes, divergence, idxes))

    assert codes.shape == (B, S, FEATURES), codes.shape
    assert idxes.shape == (B, S, PAGES), idxes.shape
    assert divergence.shape == (), divergence.shape

    # correctness vs pure-JAX reference (loose tol: approx EUP reciprocal in softmax)
    rc, rd, ri = gumbel_quantiser_reference(z, params, noise,
                                            temperature=TEMPERATURE, klw=KLW, hard=True)
    np.testing.assert_allclose(np.asarray(codes), np.asarray(rc), rtol=1e-2, atol=1e-3)
    np.testing.assert_allclose(np.asarray(idxes), np.asarray(ri), rtol=1e-2, atol=1e-3)
    np.testing.assert_allclose(float(divergence), float(rd), rtol=1e-2, atol=1e-4)

    print("KERNEL_OK")
</pallas_src>

<mosaic_0001>
module attributes {stable_mosaic.version = 11 : i64} {
  func.func @_gumbel_quantiser_kernel(%arg0: i32, %arg1: memref<64x64xf32, #tpu.memory_space<vmem>>, %arg2: memref<64x16xf32, #tpu.memory_space<vmem>>, %arg3: memref<64x16xf32, #tpu.memory_space<vmem>>, %arg4: memref<1x16xf32, #tpu.memory_space<vmem>>, %arg5: memref<64x16xf32, #tpu.memory_space<vmem>>, %arg6: memref<16x64xf32, #tpu.memory_space<vmem>>, %arg7: memref<1x64xf32, #tpu.memory_space<vmem>>, %arg8: memref<64x64xf32, #tpu.memory_space<vmem>>, %arg9: memref<64x64xf32, #tpu.memory_space<vmem>>, %arg10: memref<64x1xf32, #tpu.memory_space<vmem>>) attributes {dimension_semantics = [#tpu.dimension_semantics<parallel>], iteration_bounds = array<i64: 2>, scalar_prefetch = 0 : i64, scratch_operands = 0 : i64, tpu.core_type = #tpu.core_type<tc>, window_params = [{transform_indices = @transform_0, window_bounds = array<i64: 64, 64>}, {transform_indices = @transform_1, window_bounds = array<i64: 64, 16>}, {pipeline_mode = #tpu.pipeline_mode<synchronous>, transform_indices = @transform_2, window_bounds = array<i64: 64, 16>}, {pipeline_mode = #tpu.pipeline_mode<synchronous>, transform_indices = @transform_3, window_bounds = array<i64: 1, 16>}, {pipeline_mode = #tpu.pipeline_mode<synchronous>, transform_indices = @transform_4, window_bounds = array<i64: 64, 16>}, {pipeline_mode = #tpu.pipeline_mode<synchronous>, transform_indices = @transform_5, window_bounds = array<i64: 16, 64>}, {pipeline_mode = #tpu.pipeline_mode<synchronous>, transform_indices = @transform_6, window_bounds = array<i64: 1, 64>}, {transform_indices = @transform_7, window_bounds = array<i64: 64, 64>}, {transform_indices = @transform_8, window_bounds = array<i64: 64, 64>}, {transform_indices = @transform_9, window_bounds = array<i64: 64, 1>}]} {
    %c0 = arith.constant 0 : index
    %c0_0 = arith.constant 0 : index
    %0 = vector.load %arg1[%c0, %c0_0] : memref<64x64xf32, #tpu.memory_space<vmem>>, vector<64x64xf32>
    %c0_1 = arith.constant 0 : index
    %c0_2 = arith.constant 0 : index
    %1 = vector.load %arg3[%c0_1, %c0_2] : memref<64x16xf32, #tpu.memory_space<vmem>>, vector<64x16xf32>
    %cst = arith.constant dense<0.000000e+00> : vector<64x16xf32>
    %2 = tpu.matmul %0, %1, %cst {dimension_numbers = #tpu.dot_dimension_numbers<[1], [0], [0], [1], [0, 0, 1, 1], [], []>} : vector<64x64xf32>, vector<64x16xf32>, vector<64x16xf32> -> vector<64x16xf32>
    %c0_3 = arith.constant 0 : index
    %c0_4 = arith.constant 0 : index
    %3 = vector.load %arg4[%c0_3, %c0_4] : memref<1x16xf32, #tpu.memory_space<vmem>>, vector<1x16xf32>
    %4 = vector.broadcast %3 : vector<1x16xf32> to vector<64x16xf32>
    %5 = arith.addf %2, %4 : vector<64x16xf32>
    %c0_5 = arith.constant 0 : index
    %c0_6 = arith.constant 0 : index
    %6 = vector.load %arg2[%c0_5, %c0_6] : memref<64x16xf32, #tpu.memory_space<vmem>>, vector<64x16xf32>
    %7 = arith.addf %5, %6 : vector<64x16xf32>
    %cst_7 = arith.constant 1.000000e+00 : f32
    %8 = vector.broadcast %cst_7 : f32 to vector<64x16xf32>
    %9 = arith.mulf %7, %8 : vector<64x16xf32>
    %cst_8 = arith.constant dense<0xFF800000> : vector<64xf32>
    %10 = vector.multi_reduction <maximumf>, %9, %cst_8 [1] : vector<64x16xf32> to vector<64xf32>
    %11 = vector.shape_cast %10 : vector<64xf32> to vector<64x1xf32>
    %12 = vector.broadcast %11 : vector<64x1xf32> to vector<64x16xf32>
    %13 = arith.subf %9, %12 : vector<64x16xf32>
    %14 = math.exp %13 : vector<64x16xf32>
    %cst_9 = arith.constant dense<0.000000e+00> : vector<64xf32>
    %15 = vector.multi_reduction <add>, %14, %cst_9 [1] : vector<64x16xf32> to vector<64xf32>
    %16 = vector.shape_cast %15 : vector<64xf32> to vector<64x1xf32>
    %17 = tpu.reciprocal %16 {approx = true} : vector<64x1xf32> -> vector<64x1xf32>
    %18 = vector.broadcast %17 : vector<64x1xf32> to vector<64x16xf32>
    %19 = arith.mulf %14, %18 : vector<64x16xf32>
    %20 = tpu.iota {dimensions = array<i32: 1>} : vector<64x16xi32>
    %cst_10 = arith.constant dense<0xFF800000> : vector<64xf32>
    %21 = vector.multi_reduction <maximumf>, %19, %cst_10 [1] : vector<64x16xf32> to vector<64xf32>
    %22 = vector.shape_cast %21 : vector<64xf32> to vector<64x1xf32>
    %23 = vector.broadcast %22 : vector<64x1xf32> to vector<64x16xf32>
    %24 = arith.cmpf oge, %19, %23 : vector<64x16xf32>
    %c1073741824_i32 = arith.constant 1073741824 : i32
    %25 = vector.broadcast %c1073741824_i32 : i32 to vector<64x16xi32>
    %26 = arith.select %24, %20, %25 : vector<64x16xi1>, vector<64x16xi32>
    %cst_11 = arith.constant dense<2147483647> : vector<64xi32>
    %27 = vector.multi_reduction <minsi>, %26, %cst_11 [1] : vector<64x16xi32> to vector<64xi32>
    %28 = vector.shape_cast %27 : vector<64xi32> to vector<64x1xi32>
    %29 = vector.broadcast %28 : vector<64x1xi32> to vector<64x16xi32>
    %30 = arith.cmpi eq, %20, %29 : vector<64x16xi32>
    %31 = arith.extui %30 : vector<64x16xi1> to vector<64x16xi32>
    %32 = arith.sitofp %31 : vector<64x16xi32> to vector<64x16xf32>
    %c0_12 = arith.constant 0 : index
    %c0_13 = arith.constant 0 : index
    %33 = vector.load %arg5[%c0_12, %c0_13] : memref<64x16xf32, #tpu.memory_space<vmem>>, vector<64x16xf32>
    %cst_14 = arith.constant dense<0.000000e+00> : vector<64x64xf32>
    %34 = tpu.matmul %32, %33, %cst_14 {dimension_numbers = #tpu.dot_dimension_numbers<[1], [1], [0], [0], [0, 0, 1, 0], [], []>} : vector<64x16xf32>, vector<64x16xf32>, vector<64x64xf32> -> vector<64x64xf32>
    %c0_15 = arith.constant 0 : index
    %c0_16 = arith.constant 0 : index
    %35 = vector.load %arg9[%c0_15, %c0_16] : memref<64x64xf32, #tpu.memory_space<vmem>>, vector<64x64xf32>
    tpu.vector_store %arg9[%c0_15, %c0_16], %34 {strides = array<i32>} : memref<64x64xf32, #tpu.memory_space<vmem>>, vector<64x64xf32>,
    %cst_17 = arith.constant dense<0.000000e+00> : vector<64x16xf32>
    %36 = tpu.matmul %34, %33, %cst_17 {dimension_numbers = #tpu.dot_dimension_numbers<[1], [0], [0], [1], [0, 0, 1, 1], [], []>} : vector<64x64xf32>, vector<64x16xf32>, vector<64x16xf32> -> vector<64x16xf32>
    %cst_18 = arith.constant dense<0xFF800000> : vector<64xf32>
    %37 = vector.multi_reduction <maximumf>, %5, %cst_18 [1] : vector<64x16xf32> to vector<64xf32>
    %38 = vector.shape_cast %37 : vector<64xf32> to vector<64x1xf32>
    %39 = vector.broadcast %38 : vector<64x1xf32> to vector<64x16xf32>
    %40 = arith.subf %5, %39 : vector<64x16xf32>
    %41 = math.exp %40 : vector<64x16xf32>
    %cst_19 = arith.constant dense<0.000000e+00> : vector<64xf32>
    %42 = vector.multi_reduction <add>, %41, %cst_19 [1] : vector<64x16xf32> to vector<64xf32>
    %43 = vector.shape_cast %42 : vector<64xf32> to vector<64x1xf32>
    %44 = tpu.reciprocal %43 {approx = true} : vector<64x1xf32> -> vector<64x1xf32>
    %45 = vector.broadcast %44 : vector<64x1xf32> to vector<64x16xf32>
    %46 = arith.mulf %41, %45 : vector<64x16xf32>
    %cst_20 = arith.constant 6.400000e+01 : f32
    %47 = vector.broadcast %cst_20 : f32 to vector<64x16xf32>
    %48 = arith.mulf %46, %47 : vector<64x16xf32>
    %cst_21 = arith.constant 9.99999996E-13 : f32
    %49 = vector.broadcast %cst_21 : f32 to vector<64x16xf32>
    %50 = arith.addf %48, %49 : vector<64x16xf32>
    %51 = math.log %50 : vector<64x16xf32>
    %52 = arith.mulf %46, %51 : vector<64x16xf32>
    %cst_22 = arith.constant dense<0.000000e+00> : vector<64xf32>
    %53 = vector.multi_reduction <add>, %52, %cst_22 [1] : vector<64x16xf32> to vector<64xf32>
    %54 = vector.shape_cast %53 : vector<64xf32> to vector<64x1xf32>
    %cst_23 = arith.constant 5.000000e-04 : f32
    %55 = vector.broadcast %cst_23 : f32 to vector<64x1xf32>
    %56 = arith.mulf %55, %54 : vector<64x1xf32>
    %c0_24 = arith.constant 0 : index
    %c0_25 = arith.constant 0 : index
    %57 = vector.load %arg10[%c0_24, %c0_25] : memref<64x1xf32, #tpu.memory_space<vmem>>, vector<64x1xf32>
    tpu.vector_store %arg10[%c0_24, %c0_25], %56 {strides = array<i32>} : memref<64x1xf32, #tpu.memory_space<vmem>>, vector<64x1xf32>,
    %c0_26 = arith.constant 0 : index
    %c0_27 = arith.constant 0 : index
    %58 = vector.load %arg6[%c0_26, %c0_27] : memref<16x64xf32, #tpu.memory_space<vmem>>, vector<16x64xf32>
    %cst_28 = arith.constant dense<0.000000e+00> : vector<64x64xf32>
    %59 = tpu.matmul %36, %58, %cst_28 {dimension_numbers = #tpu.dot_dimension_numbers<[1], [0], [0], [1], [0, 0, 1, 1], [], []>} : vector<64x16xf32>, vector<16x64xf32>, vector<64x64xf32> -> vector<64x64xf32>
    %c0_29 = arith.constant 0 : index
    %c0_30 = arith.constant 0 : index
    %60 = vector.load %arg7[%c0_29, %c0_30] : memref<1x64xf32, #tpu.memory_space<vmem>>, vector<1x64xf32>
    %61 = vector.broadcast %60 : vector<1x64xf32> to vector<64x64xf32>
    %62 = arith.addf %59, %61 : vector<64x64xf32>
    %c0_31 = arith.constant 0 : index
    %c0_32 = arith.constant 0 : index
    %63 = vector.load %arg8[%c0_31, %c0_32] : memref<64x64xf32, #tpu.memory_space<vmem>>, vector<64x64xf32>
    tpu.vector_store %arg8[%c0_31, %c0_32], %62 {strides = array<i32>} : memref<64x64xf32, #tpu.memory_space<vmem>>, vector<64x64xf32>,
    return
  }
  func.func @transform_0(%arg0: i32) -> (i32, i32) {
    %c0_i32 = arith.constant 0 : i32
    %c0_i32_0 = arith.constant 0 : i32
    return %arg0, %c0_i32 : i32, i32
  }
  func.func @transform_1(%arg0: i32) -> (i32, i32) {
    %c0_i32 = arith.constant 0 : i32
    %c0_i32_0 = arith.constant 0 : i32
    return %arg0, %c0_i32 : i32, i32
  }
  func.func @transform_2(%arg0: i32) -> (i32, i32) {
    %c0_i32 = arith.constant 0 : i32
    %c0_i32_0 = arith.constant 0 : i32
    %c0_i32_1 = arith.constant 0 : i32
    return %c0_i32, %c0_i32_0 : i32, i32
  }
  func.func @transform_3(%arg0: i32) -> (i32, i32) {
    %c0_i32 = arith.constant 0 : i32
    %c0_i32_0 = arith.constant 0 : i32
    %c0_i32_1 = arith.constant 0 : i32
    return %c0_i32, %c0_i32_0 : i32, i32
  }
  func.func @transform_4(%arg0: i32) -> (i32, i32) {
    %c0_i32 = arith.constant 0 : i32
    %c0_i32_0 = arith.constant 0 : i32
    %c0_i32_1 = arith.constant 0 : i32
    return %c0_i32, %c0_i32_0 : i32, i32
  }
  func.func @transform_5(%arg0: i32) -> (i32, i32) {
    %c0_i32 = arith.constant 0 : i32
    %c0_i32_0 = arith.constant 0 : i32
    %c0_i32_1 = arith.constant 0 : i32
    return %c0_i32, %c0_i32_0 : i32, i32
  }
  func.func @transform_6(%arg0: i32) -> (i32, i32) {
    %c0_i32 = arith.constant 0 : i32
    %c0_i32_0 = arith.constant 0 : i32
    %c0_i32_1 = arith.constant 0 : i32
    return %c0_i32, %c0_i32_0 : i32, i32
  }
  func.func @transform_7(%arg0: i32) -> (i32, i32) {
    %c0_i32 = arith.constant 0 : i32
    %c0_i32_0 = arith.constant 0 : i32
    return %arg0, %c0_i32 : i32, i32
  }
  func.func @transform_8(%arg0: i32) -> (i32, i32) {
    %c0_i32 = arith.constant 0 : i32
    %c0_i32_0 = arith.constant 0 : i32
    return %arg0, %c0_i32 : i32, i32
  }
  func.func @transform_9(%arg0: i32) -> (i32, i32) {
    %c0_i32 = arith.constant 0 : i32
    %c0_i32_0 = arith.constant 0 : i32
    return %arg0, %c0_i32 : i32, i32
  }
}

</mosaic_0001>

<llo_original>
// kernel: gumbel_quantiser_forward.1
$region0: #{gumbel_quantiser_forward.1}
  #allocation0 [shape = 'u32[]', space=smem, size = 0x4, offset = 0x4, fixed_abs, tag = 'smem constant byte address 0x4 - core index']
  #allocation1 [shape = 'u32[72,128]{1,0:T(1,128)}', space=vmem, size = 0x9000, scoped, tag = 'internal scratch']
  %s0 = inlined_call_operand.vmem [shape: f32[128,64], index: 0, kind: input, shape index: {}]
  %s1 = inlined_call_operand.vmem [shape: f32[128,16], index: 1, kind: input, shape index: {}]
  %s2 = inlined_call_operand.vmem [shape: f32[64,16], index: 2, kind: input, shape index: {}]
  %s3 = inlined_call_operand.vmem [shape: f32[1,16], index: 3, kind: input, shape index: {}]
  %s4 = inlined_call_operand.vmem [shape: f32[64,16], index: 4, kind: input, shape index: {}]
  %s5 = inlined_call_operand.vmem [shape: f32[16,64], index: 5, kind: input, shape index: {}]
  %s6 = inlined_call_operand.vmem [shape: f32[1,64], index: 6, kind: input, shape index: {}]
  %s7 = inlined_call_operand.hbm [shape: f32[128,64], index: 7, kind: output, shape index: {0}]
  %s8 = inlined_call_operand.hbm [shape: f32[128,64], index: 8, kind: output, shape index: {1}]
  %s9 = inlined_call_operand.vmem [shape: f32[128,1], index: 9, kind: output, shape index: {2}]
  %10 = xla_tuple %s7, %s8, %s9
  %s11 = sld [smem:[#allocation0]]
  $region77: #{gumbel_quantiser_forward.1} parent=0
    _
  %s13 = ssub.s32 1, %s11
  %s14 = scalar_select 0, %s13, %s11
  $region1: #{gumbel_quantiser_forward.1} parent=0
    #allocation2 [shape = 'u8[65536]{0}', space=vmem, size = 0x10000, scoped, tag = 'output window, operand 0']
    #allocation3 [shape = 's32[2]{0}', space=sflag, size = 0x8, scoped, tag = 'scoped memory for gumbel_quantiser_forward.1']
    #allocation4 [shape = 'u8[65536]{0}', space=vmem, size = 0x10000, scoped, tag = 'output window, operand 1']
    #allocation5 [shape = 's32[2]{0}', space=sflag, size = 0x8, scoped, tag = 'scoped memory for gumbel_quantiser_forward.1']
    %15 = vsyncpa [#allocation3], 0
    %s16 = scalar_lea.sflag [#allocation3], 1
    %17 = vsyncpa %s16, 0
    %18 = vsyncpa [#allocation5], 0
    %s19 = scalar_lea.sflag [#allocation5], 1
    %20 = vsyncpa %s19, 0
    loop: start=0, step=1, limit=4
    $region2: #{gumbel_quantiser_forward.1} parent=1 // loop_pre_header
      _
    $region3: #{gumbel_quantiser_forward.1} parent=1 // loop_header
      %s22 = sphi 0, %s26
      %p23 = scmp.ge.s32.totalorder %s22, 4
      %s32 = sphi 0, %s34
      %s35 = sphi 0, %s32
      %s36 = sphi 0, %s35
      %s52 = sphi 0, %s36
      %s58 = sphi 0, %s60
      %s61 = sphi 0, %s58
      %s62 = sphi 0, %s61
      %s78 = sphi 0, %s62
      %s82 = sphi 0, %s82
      %s84 = sphi 0, %s82
      %s85 = sphi 0, %s84
      %s99 = sphi 0, %s85
      %s103 = sphi 0, %s103
      %s105 = sphi 0, %s103
      %s106 = sphi 0, %s105
      %s120 = sphi 0, %s106
      %s124 = sphi 0, %s124
      %s126 = sphi 0, %s124
      %s127 = sphi 0, %s126
      %s141 = sphi 0, %s127
      %s145 = sphi 0, %s145
      %s147 = sphi 0, %s145
      %s148 = sphi 0, %s147
      %s162 = sphi 0, %s148
      %s166 = sphi 0, %s166
      %s168 = sphi 0, %s166
      %s169 = sphi 0, %s168
      %s183 = sphi 0, %s169
      %s189 = sphi 0, %s191
      %s192 = sphi 0, %s189
      %s193 = sphi 0, %s192
      %s209 = sphi 0, %s193
      %s215 = sphi 0, %s217
      %s218 = sphi 0, %s215
      %s219 = sphi 0, %s218
      %s235 = sphi 0, %s219
      %s241 = sphi 0, %s243
      %s244 = sphi 0, %s241
      %s245 = sphi 0, %s244
      %s261 = sphi 0, %s245
    $region4: #{gumbel_quantiser_forward.1} parent=1 // loop_header_branch
      %25 = sbr.rel (%p23) target = $region8
    $region5: #{gumbel_quantiser_forward.1} parent=1 // loop_body
      %s27 = ssub.s32 %s22, 1
      %s28 = ssub.s32 %s22, 2
      %s29 = sadd.s32 %s22, 1
      %s30 = ssub.s32 %s22, %s29
      %p31 = scmp.eq.s32.totalorder %s30, 0
      %s33 = sadd.s32 %s32, 1
      %s34 = scalar_select %p31, %s32, %s33
      %p37 = pneg %p31
      %p38 = scmp.eq.s32.totalorder %s22, 1
      %p39 = por %p37, %p38
      %p40 = scmp.ne.s32.totalorder %s32, %s35
      %p41 = scmp.eq.s32.totalorder %s22, 0
      %p42 = por %p40, %p41
      %p43 = scmp.ne.s32.totalorder %s32, %s35
      %p44 = scmp.eq.s32.totalorder %s27, 1
      %p45 = por %p43, %p44
      %p46 = scmp.ne.s32.totalorder %s35, %s36
      %p47 = scmp.eq.s32.totalorder %s27, 0
      %p48 = por %p46, %p47
      %p49 = scmp.ne.s32.totalorder %s35, %s36
      %p50 = scmp.eq.s32.totalorder %s28, 1
      %p51 = por %p49, %p50
      %p53 = scmp.ne.s32.totalorder %s36, %s52
      %p54 = scmp.eq.s32.totalorder %s28, 0
      %p55 = por %p53, %p54
      %s56 = ssub.s32 %s22, %s29
      %p57 = scmp.eq.s32.totalorder %s56, 0
      %s59 = sadd.s32 %s58, 1
      %s60 = scalar_select %p57, %s58, %s59
      %p63 = pneg %p57
      %p64 = scmp.eq.s32.totalorder %s22, 1
      %p65 = por %p63, %p64
      %p66 = scmp.ne.s32.totalorder %s58, %s61
      %p67 = scmp.eq.s32.totalorder %s22, 0
      %p68 = por %p66, %p67
      %p69 = scmp.ne.s32.totalorder %s58, %s61
      %p70 = scmp.eq.s32.totalorder %s27, 1
      %p71 = por %p69, %p70
      %p72 = scmp.ne.s32.totalorder %s61, %s62
      %p73 = scmp.eq.s32.totalorder %s27, 0
      %p74 = por %p72, %p73
      %p75 = scmp.ne.s32.totalorder %s61, %s62
      %p76 = scmp.eq.s32.totalorder %s28, 1
      %p77 = por %p75, %p76
      %p79 = scmp.ne.s32.totalorder %s62, %s78
      %p80 = scmp.eq.s32.totalorder %s28, 0
      %p81 = por %p79, %p80
      %s83 = sadd.s32 %s82, 1
      %p86 = scmp.eq.s32.totalorder %s22, 1
      %p87 = scmp.ne.s32.totalorder %s82, %s84
      %p88 = scmp.eq.s32.totalorder %s22, 0
      %p89 = por %p87, %p88
      %p90 = scmp.ne.s32.totalorder %s82, %s84
      %p91 = scmp.eq.s32.totalorder %s27, 1
      %p92 = por %p90, %p91
      %p93 = scmp.ne.s32.totalorder %s84, %s85
      %p94 = scmp.eq.s32.totalorder %s27, 0
      %p95 = por %p93, %p94
      %p96 = scmp.ne.s32.totalorder %s84, %s85
      %p97 = scmp.eq.s32.totalorder %s28, 1
      %p98 = por %p96, %p97
      %p100 = scmp.ne.s32.totalorder %s85, %s99
      %p101 = scmp.eq.s32.totalorder %s28, 0
      %p102 = por %p100, %p101
      %s104 = sadd.s32 %s103, 1
      %p107 = scmp.eq.s32.totalorder %s22, 1
      %p108 = scmp.ne.s32.totalorder %s103, %s105
      %p109 = scmp.eq.s32.totalorder %s22, 0
      %p110 = por %p108, %p109
      %p111 = scmp.ne.s32.totalorder %s103, %s105
      %p112 = scmp.eq.s32.totalorder %s27, 1
      %p113 = por %p111, %p112
      %p114 = scmp.ne.s32.totalorder %s105, %s106
      %p115 = scmp.eq.s32.totalorder %s27, 0
      %p116 = por %p114, %p115
      %p117 = scmp.ne.s32.totalorder %s105, %s106
      %p118 = scmp.eq.s32.totalorder %s28, 1
      %p119 = por %p117, %p118
      %p121 = scmp.ne.s32.totalorder %s106, %s120
      %p122 = scmp.eq.s32.totalorder %s28, 0
      %p123 = por %p121, %p122
      %s125 = sadd.s32 %s124, 1
      %p128 = scmp.eq.s32.totalorder %s22, 1
      %p129 = scmp.ne.s32.totalorder %s124, %s126
      %p130 = scmp.eq.s32.totalorder %s22, 0
      %p131 = por %p129, %p130
      %p132 = scmp.ne.s32.totalorder %s124, %s126
      %p133 = scmp.eq.s32.totalorder %s27, 1
      %p134 = por %p132, %p133
      %p135 = scmp.ne.s32.totalorder %s126, %s127
      %p136 = scmp.eq.s32.totalorder %s27, 0
      %p137 = por %p135, %p136
      %p138 = scmp.ne.s32.totalorder %s126, %s127
      %p139 = scmp.eq.s32.totalorder %s28, 1
      %p140 = por %p138, %p139
      %p142 = scmp.ne.s32.totalorder %s127, %s141
      %p143 = scmp.eq.s32.totalorder %s28, 0
      %p144 = por %p142, %p143
      %s146 = sadd.s32 %s145, 1
      %p149 = scmp.eq.s32.totalorder %s22, 1
      %p150 = scmp.ne.s32.totalorder %s145, %s147
      %p151 = scmp.eq.s32.totalorder %s22, 0
      %p152 = por %p150, %p151
      %p153 = scmp.ne.s32.totalorder %s145, %s147
      %p154 = scmp.eq.s32.totalorder %s27, 1
      %p155 = por %p153, %p154
      %p156 = scmp.ne.s32.totalorder %s147, %s148
      %p157 = scmp.eq.s32.totalorder %s27, 0
      %p158 = por %p156, %p157
      %p159 = scmp.ne.s32.totalorder %s147, %s148
      %p160 = scmp.eq.s32.totalorder %s28, 1
      %p161 = por %p159, %p160
      %p163 = scmp.ne.s32.totalorder %s148, %s162
      %p164 = scmp.eq.s32.totalorder %s28, 0
      %p165 = por %p163, %p164
      %s167 = sadd.s32 %s166, 1
      %p170 = scmp.eq.s32.totalorder %s22, 1
      %p171 = scmp.ne.s32.totalorder %s166, %s168
      %p172 = scmp.eq.s32.totalorder %s22, 0
      %p173 = por %p171, %p172
      %p174 = scmp.ne.s32.totalorder %s166, %s168
      %p175 = scmp.eq.s32.totalorder %s27, 1
      %p176 = por %p174, %p175
      %p177 = scmp.ne.s32.totalorder %s168, %s169
      %p178 = scmp.eq.s32.totalorder %s27, 0
      %p179 = por %p177, %p178
      %p180 = scmp.ne.s32.totalorder %s168, %s169
      %p181 = scmp.eq.s32.totalorder %s28, 1
      %p182 = por %p180, %p181
      %p184 = scmp.ne.s32.totalorder %s169, %s183
      %p185 = scmp.eq.s32.totalorder %s28, 0
      %p186 = por %p184, %p185
      %s187 = ssub.s32 %s22, %s29
      %p188 = scmp.eq.s32.totalorder %s187, 0
      %s190 = sadd.s32 %s189, 1
      %s191 = scalar_select %p188, %s189, %s190
      %p194 = pneg %p188
      %p195 = scmp.eq.s32.totalorder %s22, 1
      %p196 = por %p194, %p195
      %p197 = scmp.ne.s32.totalorder %s189, %s192
      %p198 = scmp.eq.s32.totalorder %s22, 0
      %p199 = por %p197, %p198
      %p200 = scmp.ne.s32.totalorder %s189, %s192
      %p201 = scmp.eq.s32.totalorder %s27, 1
      %p202 = por %p200, %p201
      %p203 = scmp.ne.s32.totalorder %s192, %s193
      %p204 = scmp.eq.s32.totalorder %s27, 0
      %p205 = por %p203, %p204
      %p206 = scmp.ne.s32.totalorder %s192, %s193
      %p207 = scmp.eq.s32.totalorder %s28, 1
      %p208 = por %p206, %p207
      %p210 = scmp.ne.s32.totalorder %s193, %s209
      %p211 = scmp.eq.s32.totalorder %s28, 0
      %p212 = por %p210, %p211
      %s213 = ssub.s32 %s22, %s29
      %p214 = scmp.eq.s32.totalorder %s213, 0
      %s216 = sadd.s32 %s215, 1
      %s217 = scalar_select %p214, %s215, %s216
      %p220 = pneg %p214
      %p221 = scmp.eq.s32.totalorder %s22, 1
      %p222 = por %p220, %p221
      %p223 = scmp.ne.s32.totalorder %s215, %s218
      %p224 = scmp.eq.s32.totalorder %s22, 0
      %p225 = por %p223, %p224
      %p226 = scmp.ne.s32.totalorder %s215, %s218
      %p227 = scmp.eq.s32.totalorder %s27, 1
      %p228 = por %p226, %p227
      %p229 = scmp.ne.s32.totalorder %s218, %s219
      %p230 = scmp.eq.s32.totalorder %s27, 0
      %p231 = por %p229, %p230
      %p232 = scmp.ne.s32.totalorder %s218, %s219
      %p233 = scmp.eq.s32.totalorder %s28, 1
      %p234 = por %p232, %p233
      %p236 = scmp.ne.s32.totalorder %s219, %s235
      %p237 = scmp.eq.s32.totalorder %s28, 0
      %p238 = por %p236, %p237
      %s239 = ssub.s32 %s22, %s29
      %p240 = scmp.eq.s32.totalorder %s239, 0
      %s242 = sadd.s32 %s241, 1
      %s243 = scalar_select %p240, %s241, %s242
      %p246 = pneg %p240
      %p247 = scmp.eq.s32.totalorder %s22, 1
      %p248 = por %p246, %p247
      %p249 = scmp.ne.s32.totalorder %s241, %s244
      %p250 = scmp.eq.s32.totalorder %s22, 0
      %p251 = por %p249, %p250
      %p252 = scmp.ne.s32.totalorder %s241, %s244
      %p253 = scmp.eq.s32.totalorder %s27, 1
      %p254 = por %p252, %p253
      %p255 = scmp.ne.s32.totalorder %s244, %s245
      %p256 = scmp.eq.s32.totalorder %s27, 0
      %p257 = por %p255, %p256
      %p258 = scmp.ne.s32.totalorder %s244, %s245
      %p259 = scmp.eq.s32.totalorder %s28, 1
      %p260 = por %p258, %p259
      %p262 = scmp.ne.s32.totalorder %s245, %s261
      %p263 = scmp.eq.s32.totalorder %s28, 0
      %p264 = por %p262, %p263
      %p265 = scmp.le.s32.totalorder 1, %s22
      %p266 = scmp.lt.s32.totalorder %s22, 3
      %p267 = pnand %p265, %p266
      %p268 = pneg %p267
      // Predicated region
      $region9: #{gumbel_quantiser_forward.1} parent=5 // pred_check
        _
      $region10: #{gumbel_quantiser_forward.1} parent=5 // pred_check_branch
        %270 = sbr.rel (%p267) target = $region12
      $region11: #{gumbel_quantiser_forward.1} parent=5 // pred_region
        %s271 = ssub.s32 %s22, 1
        // Predicated region
        $region13: #{gumbel_quantiser_forward.1} parent=11 // pred_check
          %p272 = pneg %p95
        $region14: #{gumbel_quantiser_forward.1} parent=11 // pred_check_branch
          %274 = sbr.rel (%p272) target = $region16
        $region15: #{gumbel_quantiser_forward.1} parent=11 // pred_region
          _
        $region16: #{gumbel_quantiser_forward.1} parent=11 // pred_fallthru
          _
        // Predicated region
        $region17: #{gumbel_quantiser_forward.1} parent=11 // pred_check
          %p275 = pneg %p116
        $region18: #{gumbel_quantiser_forward.1} parent=11 // pred_check_branch
          %277 = sbr.rel (%p275) target = $region20
        $region19: #{gumbel_quantiser_forward.1} parent=11 // pred_region
          _
        $region20: #{gumbel_quantiser_forward.1} parent=11 // pred_fallthru
          _
        // Predicated region
        $region21: #{gumbel_quantiser_forward.1} parent=11 // pred_check
          %p278 = pneg %p137
        $region22: #{gumbel_quantiser_forward.1} parent=11 // pred_check_branch
          %280 = sbr.rel (%p278) target = $region24
        $region23: #{gumbel_quantiser_forward.1} parent=11 // pred_region
          _
        $region24: #{gumbel_quantiser_forward.1} parent=11 // pred_fallthru
          _
        // Predicated region
        $region25: #{gumbel_quantiser_forward.1} parent=11 // pred_check
          %p281 = pneg %p158
        $region26: #{gumbel_quantiser_forward.1} parent=11 // pred_check_branch
          %283 = sbr.rel (%p281) target = $region28
        $region27: #{gumbel_quantiser_forward.1} parent=11 // pred_region
          _
        $region28: #{gumbel_quantiser_forward.1} parent=11 // pred_fallthru
          _
        // Predicated region
        $region29: #{gumbel_quantiser_forward.1} parent=11 // pred_check
          %p284 = pneg %p179
        $region30: #{gumbel_quantiser_forward.1} parent=11 // pred_check_branch
          %286 = sbr.rel (%p284) target = $region32
        $region31: #{gumbel_quantiser_forward.1} parent=11 // pred_region
          _
        $region32: #{gumbel_quantiser_forward.1} parent=11 // pred_fallthru
          _
      $region12: #{gumbel_quantiser_forward.1} parent=5 // pred_fallthru
        _
      %p287 = scmp.lt.s32.totalorder %s22, 2
      // Predicated region
      $region33: #{gumbel_quantiser_forward.1} parent=5 // pred_check
        %p288 = pneg %p287
      $region34: #{gumbel_quantiser_forward.1} parent=5 // pred_check_branch
        %290 = sbr.rel (%p288) target = $region36
      $region35: #{gumbel_quantiser_forward.1} parent=5 // pred_region
        // Predicated region
        $region37: #{gumbel_quantiser_forward.1} parent=35 // pred_check
          %p291 = pneg %p42
        $region38: #{gumbel_quantiser_forward.1} parent=35 // pred_check_branch
          %293 = sbr.rel (%p291) target = $region40
        $region39: #{gumbel_quantiser_forward.1} parent=35 // pred_region
          %s294 = smul.u32 8, %s22
          %p295 = scmp.lt.s32.totalorder %s294, 15
          %s296 = scalar_select %p295, %s294, 15
          %s297 = smul.addr %s296, 8
          %s298 = scalar_lea.vmem %s0, %s297
          %s299 = smul.u32 8, %s22
        $region40: #{gumbel_quantiser_forward.1} parent=35 // pred_fallthru
          _
        // Predicated region
        $region41: #{gumbel_quantiser_forward.1} parent=35 // pred_check
          %p300 = pneg %p68
        $region42: #{gumbel_quantiser_forward.1} parent=35 // pred_check_branch
          %302 = sbr.rel (%p300) target = $region44
        $region43: #{gumbel_quantiser_forward.1} parent=35 // pred_region
          %s303 = smul.u32 8, %s22
          %p304 = scmp.lt.s32.totalorder %s303, 15
          %s305 = scalar_select %p304, %s303, 15
          %s306 = smul.addr %s305, 8
          %s307 = scalar_lea.vmem %s1, %s306
          %s308 = smul.u32 8, %s22
        $region44: #{gumbel_quantiser_forward.1} parent=35 // pred_fallthru
          _
      $region36: #{gumbel_quantiser_forward.1} parent=5 // pred_fallthru
        _
      %p309 = scmp.le.s32.totalorder 1, %s22
      %p310 = scmp.lt.s32.totalorder %s22, 3
      %p311 = pnand %p309, %p310
      %p312 = pneg %p311
      // Predicated region
      $region45: #{gumbel_quantiser_forward.1} parent=5 // pred_check
        _
      $region46: #{gumbel_quantiser_forward.1} parent=5 // pred_check_branch
        %314 = sbr.rel (%p311) target = $region48
      $region47: #{gumbel_quantiser_forward.1} parent=5 // pred_region
        %s315 = ssub.s32 %s22, 1
        %s316 = smul.u32 8, %s27
        %p317 = scmp.lt.s32.totalorder %s316, 15
        %s318 = scalar_select %p317, %s316, 15
        %s319 = smul.addr %s318, 8
        %s320 = scalar_lea.vmem %s0, %s319
        %p321 = pneg %p48
        %p322 = pneg %p45
        %s323 = smul.u32 8, %s27
        %p324 = scmp.lt.s32.totalorder %s323, 15
        %s325 = scalar_select %p324, %s323, 15
        %s326 = smul.addr %s325, 8
        %s327 = scalar_lea.vmem %s1, %s326
        %p328 = pneg %p74
        %p329 = pneg %p71
        %p330 = pneg %p95
        %p331 = pneg %p92
        %p332 = pneg %p116
        %p333 = pneg %p113
        %p334 = pneg %p137
        %p335 = pneg %p134
        %p336 = pneg %p158
        %p337 = pneg %p155
        %p338 = pneg %p179
        %p339 = pneg %p176
        %p340 = pneg %p205
        %p341 = pneg %p202
        %s342 = sand.u32 %s192, 1
        %s343 = scalar_lea.sflag [#allocation3], %s342
        %s344 = sand.u32 %s192, 1
        %s345 = smul.addr %s344, 64
        %s346 = scalar_lea.vmem [#allocation2], %s345
        %p347 = pneg %p231
        %p348 = pneg %p228
        %s349 = sand.u32 %s218, 1
        %s350 = scalar_lea.sflag [#allocation5], %s349
        %s351 = sand.u32 %s218, 1
        %s352 = smul.addr %s351, 64
        %s353 = scalar_lea.vmem [#allocation4], %s352
        %p354 = pneg %p257
        %p355 = pneg %p254
        %s356 = smul.u32 8, %s27
        %p357 = scmp.lt.s32.totalorder %s356, 15
        %s358 = scalar_select %p357, %s356, 15
        %s359 = smul.addr %s358, 8
        %s360 = scalar_lea.vmem %s9, %s359
        %s361 = smul.u32 8, %s27
        %p362 = scmp.lt.s32.totalorder %s361, 15
        %s363 = scalar_select %p362, %s361, 15
        %s364 = smul.addr %s363, 8
        %s365 = scalar_lea.vmem %s0, %s364
        %s366 = smul.u32 8, %s27
        %s367 = smul.u32 8, %s27
        %p368 = scmp.lt.s32.totalorder %s367, 15
        %s369 = scalar_select %p368, %s367, 15
        %s370 = smul.addr %s369, 8
        %s371 = scalar_lea.vmem %s1, %s370
        %s372 = smul.u32 8, %s27
        %s373 = smul.u32 8, %s27
        %s374 = smul.u32 8, %s27
        %s375 = smul.u32 8, %s27
        %p376 = scmp.lt.s32.totalorder %s375, 15
        %s377 = scalar_select %p376, %s375, 15
        %s378 = smul.addr %s377, 8
        %s379 = scalar_lea.vmem %s9, %s378
        %s380 = smul.u32 8, %s27
        %v381 = vld [vmem:[%s365] sm:$0xff]
        %v382 = vld [vmem:[%s365 + $0x8] sm:$0xff]
        %v383 = vld [vmem:[%s365 + $0x10] sm:$0xff]
        %v384 = vld [vmem:[%s365 + $0x18] sm:$0xff]
        %v385 = vld [vmem:[%s365 + $0x20] sm:$0xff]
        %v386 = vld [vmem:[%s365 + $0x28] sm:$0xff]
        %v387 = vld [vmem:[%s365 + $0x30] sm:$0xff]
        %v388 = vld [vmem:[%s365 + $0x38] sm:$0xff]
        %v389 = vld [vmem:[%s2] sm:$0xff]
        %v390 = vld [vmem:[%s2 + $0x8] sm:$0xff]
        %v391 = vld [vmem:[%s2 + $0x10] sm:$0xff]
        %v392 = vld [vmem:[%s2 + $0x18] sm:$0xff]
        %v393 = vld [vmem:[%s2 + $0x20] sm:$0xff]
        %v394 = vld [vmem:[%s2 + $0x28] sm:$0xff]
        %v395 = vld [vmem:[%s2 + $0x30] sm:$0xff]
        %v396 = vld [vmem:[%s2 + $0x38] sm:$0xff]
        %v397 = vld [vmem:[%s3] sm:$0x1]
        %v399 = vperm.slane %v397, 0
        %vm401 = vcmask 523264
        %v403 = vsel %vm401, %v381, 0
        %v406 = vsel %vm401, %v382, 0
        %v409 = vsel %vm401, %v383, 0
        %v412 = vsel %vm401, %v384, 0
        %v415 = vsel %vm401, %v385, 0
        %v418 = vsel %vm401, %v386, 0
        %v421 = vsel %vm401, %v387, 0
        %v424 = vsel %vm401, %v388, 0
        %426 = vmatpush.msra.mxu0 0.0
        %427 = vmatpush.msra.mxu0 0.0
        %428 = vmatpush.msra.mxu0 0.0
        %429 = vmatpush.msra.mxu0 0.0
        %430 = vmatpush.msra.mxu0 0.0
        %431 = vmatpush.msra.mxu0 0.0
        %432 = vmatpush.msra.mxu0 0.0
        %433 = vmatpush.msra.mxu0 0.0
        %434 = vmatpush.msra.mxu0 %v396
        %435 = vmatpush.msra.mxu0 %v395
        %436 = vmatpush.msra.mxu0 %v394
        %437 = vmatpush.msra.mxu0 %v393
        %438 = vmatpush.msra.mxu0 %v392
        %439 = vmatpush.msra.mxu0 %v391
        %440 = vmatpush.msra.mxu0 %v390
        %441 = vmatpush.msra.mxu0 %v389
        %442 = vmatmul.f32.gmra.mxu0 %v403
        %v443 = vpop.f32.mrf.mxu0
        %v444 = vadd.f32 %v399, %v443
        %445 = vmatmul.f32.gmra.mxu0 %v406
        %v446 = vpop.f32.mrf.mxu0
        %v447 = vadd.f32 %v399, %v446
        %448 = vmatmul.f32.gmra.mxu0 %v409
        %v449 = vpop.f32.mrf.mxu0
        %v450 = vadd.f32 %v399, %v449
        %451 = vmatmul.f32.gmra.mxu0 %v412
        %v452 = vpop.f32.mrf.mxu0
        %v453 = vadd.f32 %v399, %v452
        %454 = vmatmul.f32.gmra.mxu0 %v415
        %v455 = vpop.f32.mrf.mxu0
        %v456 = vadd.f32 %v399, %v455
        %457 = vmatmul.f32.gmra.mxu0 %v418
        %v458 = vpop.f32.mrf.mxu0
        %v459 = vadd.f32 %v399, %v458
        %460 = vmatmul.f32.gmra.mxu0 %v421
        %v461 = vpop.f32.mrf.mxu0
        %v462 = vadd.f32 %v399, %v461
        %463 = vmatmul.f32.gmra.mxu0 %v424
        %v464 = vpop.f32.mrf.mxu0
        %v465 = vadd.f32 %v399, %v464
        %466 = vdwg.mxu0
        %v467 = vld [vmem:[%s371] sm:$0xff]
        %v468 = vld [vmem:[%s371 + $0x8] sm:$0xff]
        %v469 = vld [vmem:[%s371 + $0x10] sm:$0xff]
        %v470 = vld [vmem:[%s371 + $0x18] sm:$0xff]
        %v471 = vld [vmem:[%s371 + $0x20] sm:$0xff]
        %v472 = vld [vmem:[%s371 + $0x28] sm:$0xff]
        %v473 = vld [vmem:[%s371 + $0x30] sm:$0xff]
        %v474 = vld [vmem:[%s371 + $0x38] sm:$0xff]
        %v475 = vadd.f32 %v444, %v467
        %v476 = vadd.f32 %v447, %v468
        %v477 = vadd.f32 %v450, %v469
        %v478 = vadd.f32 %v453, %v470
        %v479 = vadd.f32 %v456, %v471
        %v480 = vadd.f32 %v459, %v472
        %v481 = vadd.f32 %v462, %v473
        %v482 = vadd.f32 %v465, %v474
        %vm483 = vcmask 130048
        %v484 = vsel %vm483, %v475, -inf
        %485 = vmax.xlane.f32.xlu0 %v484
        %v486 = vpop.xlane.xlu0 %485
        %v487 = vsel %vm483, %v476, -inf
        %488 = vmax.xlane.f32.xlu0 %v487
        %v489 = vpop.xlane.xlu0 %488
        %v490 = vsel %vm483, %v477, -inf
        %491 = vmax.xlane.f32.xlu0 %v490
        %v492 = vpop.xlane.xlu0 %491
        %v493 = vsel %vm483, %v478, -inf
        %494 = vmax.xlane.f32.xlu0 %v493
        %v495 = vpop.xlane.xlu0 %494
        %v496 = vsel %vm483, %v479, -inf
        %497 = vmax.xlane.f32.xlu0 %v496
        %v498 = vpop.xlane.xlu0 %497
        %v499 = vsel %vm483, %v480, -inf
        %500 = vmax.xlane.f32.xlu0 %v499
        %v501 = vpop.xlane.xlu0 %500
        %v502 = vsel %vm483, %v481, -inf
        %503 = vmax.xlane.f32.xlu0 %v502
        %v504 = vpop.xlane.xlu0 %503
        %v505 = vsel %vm483, %v482, -inf
        %506 = vmax.xlane.f32.xlu0 %v505
        %v507 = vpop.xlane.xlu0 %506
        %v508 = vsub.f32 %v475, %v486
        %v509 = vsub.f32 %v476, %v489
        %v510 = vsub.f32 %v477, %v492
        %v511 = vsub.f32 %v478, %v495
        %v512 = vsub.f32 %v479, %v498
        %v513 = vsub.f32 %v480, %v501
        %v514 = vsub.f32 %v481, %v504
        %v515 = vsub.f32 %v482, %v507
        %v516 = vmul.f32 %v508, 1.442695
        %v517 = vpow.pop %v516
        %v518 = vmul.f32 %v509, 1.442695
        %v519 = vpow.pop %v518
        %v520 = vmul.f32 %v510, 1.442695
        %v521 = vpow.pop %v520
        %v522 = vmul.f32 %v511, 1.442695
        %v523 = vpow.pop %v522
        %v524 = vmul.f32 %v512, 1.442695
        %v525 = vpow.pop %v524
        %v526 = vmul.f32 %v513, 1.442695
        %v527 = vpow.pop %v526
        %v528 = vmul.f32 %v514, 1.442695
        %v529 = vpow.pop %v528
        %v530 = vmul.f32 %v515, 1.442695
        %v531 = vpow.pop %v530
        %v532 = vsel %vm483, %v517, 0.0
        %533 = vadd.xlane.f32.xlu0 %v532
        %v534 = vpop.xlane.xlu0 %533
        %v535 = vsel %vm483, %v519, 0.0
        %536 = vadd.xlane.f32.xlu0 %v535
        %v537 = vpop.xlane.xlu0 %536
        %v538 = vsel %vm483, %v521, 0.0
        %539 = vadd.xlane.f32.xlu0 %v538
        %v540 = vpop.xlane.xlu0 %539
        %v541 = vsel %vm483, %v523, 0.0
        %542 = vadd.xlane.f32.xlu0 %v541
        %v543 = vpop.xlane.xlu0 %542
        %v544 = vsel %vm483, %v525, 0.0
        %545 = vadd.xlane.f32.xlu0 %v544
        %v546 = vpop.xlane.xlu0 %545
        %v547 = vsel %vm483, %v527, 0.0
        %548 = vadd.xlane.f32.xlu0 %v547
        %v549 = vpop.xlane.xlu0 %548
        %v550 = vsel %vm483, %v529, 0.0
        %551 = vadd.xlane.f32.xlu0 %v550
        %v552 = vpop.xlane.xlu0 %551
        %v553 = vsel %vm483, %v531, 0.0
        %554 = vadd.xlane.f32.xlu0 %v553
        %v555 = vpop.xlane.xlu0 %554
        %v556 = vrcp.pop %v534
        %v557 = vrcp.pop %v537
        %v558 = vrcp.pop %v540
        %v559 = vrcp.pop %v543
        %v560 = vrcp.pop %v546
        %v561 = vrcp.pop %v549
        %v562 = vrcp.pop %v552
        %v563 = vrcp.pop %v555
        %v564 = vmul.f32 %v517, %v556
        %v565 = vmul.f32 %v519, %v557
        %v566 = vmul.f32 %v521, %v558
        %v567 = vmul.f32 %v523, %v559
        %v568 = vmul.f32 %v525, %v560
        %v569 = vmul.f32 %v527, %v561
        %v570 = vmul.f32 %v529, %v562
        %v571 = vmul.f32 %v531, %v563
        %v572 = vlaneseq
        %v573 = vand.u32 %v572, 127
        %v574 = vsel %vm483, %v564, -inf
        %575 = vmax.xlane.f32.xlu0 %v574
        %v576 = vpop.xlane.xlu0 %575
        %v577 = vsel %vm483, %v565, -inf
        %578 = vmax.xlane.f32.xlu0 %v577
        %v579 = vpop.xlane.xlu0 %578
        %v580 = vsel %vm483, %v566, -inf
        %581 = vmax.xlane.f32.xlu0 %v580
        %v582 = vpop.xlane.xlu0 %581
        %v583 = vsel %vm483, %v567, -inf
        %584 = vmax.xlane.f32.xlu0 %v583
        %v585 = vpop.xlane.xlu0 %584
        %v586 = vsel %vm483, %v568, -inf
        %587 = vmax.xlane.f32.xlu0 %v586
        %v588 = vpop.xlane.xlu0 %587
        %v589 = vsel %vm483, %v569, -inf
        %590 = vmax.xlane.f32.xlu0 %v589
        %v591 = vpop.xlane.xlu0 %590
        %v592 = vsel %vm483, %v570, -inf
        %593 = vmax.xlane.f32.xlu0 %v592
        %v594 = vpop.xlane.xlu0 %593
        %v595 = vsel %vm483, %v571, -inf
        %596 = vmax.xlane.f32.xlu0 %v595
        %v597 = vpop.xlane.xlu0 %596
        %vm598 = vcmp.ge.f32.partialorder %v564, %v576
        %vm599 = vcmp.ge.f32.partialorder %v565, %v579
        %vm600 = vcmp.ge.f32.partialorder %v566, %v582
        %vm601 = vcmp.ge.f32.partialorder %v567, %v585
        %vm602 = vcmp.ge.f32.partialorder %v568, %v588
        %vm603 = vcmp.ge.f32.partialorder %v569, %v591
        %vm604 = vcmp.ge.f32.partialorder %v570, %v594
        %vm605 = vcmp.ge.f32.partialorder %v571, %v597
        %v606 = vsel %vm598, %v573, 1073741824
        %v607 = vsel %vm599, %v573, 1073741824
        %v608 = vsel %vm600, %v573, 1073741824
        %v609 = vsel %vm601, %v573, 1073741824
        %v610 = vsel %vm602, %v573, 1073741824
        %v611 = vsel %vm603, %v573, 1073741824
        %v612 = vsel %vm604, %v573, 1073741824
        %v613 = vsel %vm605, %v573, 1073741824
        %v614 = vsel %vm483, %v606, 2147483647
        %v615 = vand.u32 %v614, 65535
        %v616 = vshra.s32 %v614, 16
        %v617 = vcvt.s32.f32 %v615
        %v618 = vcvt.s32.f32 %v616
        %619 = vmin.xlane.f32.xlu0 %v618
        %v620 = vpop.xlane.xlu0 %619
        %vm621 = vcmp.eq.f32.partialorder %v618, %v620
        %v622 = vsel %vm621, %v617, inf
        %623 = vmin.xlane.f32.xlu0 %v622
        %v624 = vpop.xlane.xlu0 %623
        %v625 = vcvt.f32.s32 %v624
        %v626 = vcvt.f32.s32 %v620
        %v627 = vshll.u32 %v626, 16
        %v628 = vadd.s32 %v627, %v625
        %v629 = vsel %vm483, %v607, 2147483647
        %v630 = vand.u32 %v629, 65535
        %v631 = vshra.s32 %v629, 16
        %v632 = vcvt.s32.f32 %v630
        %v633 = vcvt.s32.f32 %v631
        %634 = vmin.xlane.f32.xlu0 %v633
        %v635 = vpop.xlane.xlu0 %634
        %vm636 = vcmp.eq.f32.partialorder %v633, %v635
        %v637 = vsel %vm636, %v632, inf
        %638 = vmin.xlane.f32.xlu0 %v637
        %v639 = vpop.xlane.xlu0 %638
        %v640 = vcvt.f32.s32 %v639
        %v641 = vcvt.f32.s32 %v635
        %v642 = vshll.u32 %v641, 16
        %v643 = vadd.s32 %v642, %v640
        %v644 = vsel %vm483, %v608, 2147483647
        %v645 = vand.u32 %v644, 65535
        %v646 = vshra.s32 %v644, 16
        %v647 = vcvt.s32.f32 %v645
        %v648 = vcvt.s32.f32 %v646
        %649 = vmin.xlane.f32.xlu0 %v648
        %v650 = vpop.xlane.xlu0 %649
        %vm651 = vcmp.eq.f32.partialorder %v648, %v650
        %v652 = vsel %vm651, %v647, inf
        %653 = vmin.xlane.f32.xlu0 %v652
        %v654 = vpop.xlane.xlu0 %653
        %v655 = vcvt.f32.s32 %v654
        %v656 = vcvt.f32.s32 %v650
        %v657 = vshll.u32 %v656, 16
        %v658 = vadd.s32 %v657, %v655
        %v659 = vsel %vm483, %v609, 2147483647
        %v660 = vand.u32 %v659, 65535
        %v661 = vshra.s32 %v659, 16
        %v662 = vcvt.s32.f32 %v660
        %v663 = vcvt.s32.f32 %v661
        %664 = vmin.xlane.f32.xlu0 %v663
        %v665 = vpop.xlane.xlu0 %664
        %vm666 = vcmp.eq.f32.partialorder %v663, %v665
        %v667 = vsel %vm666, %v662, inf
        %668 = vmin.xlane.f32.xlu0 %v667
        %v669 = vpop.xlane.xlu0 %668
        %v670 = vcvt.f32.s32 %v669
        %v671 = vcvt.f32.s32 %v665
        %v672 = vshll.u32 %v671, 16
        %v673 = vadd.s32 %v672, %v670
        %v674 = vsel %vm483, %v610, 2147483647
        %v675 = vand.u32 %v674, 65535
        %v676 = vshra.s32 %v674, 16
        %v677 = vcvt.s32.f32 %v675
        %v678 = vcvt.s32.f32 %v676
        %679 = vmin.xlane.f32.xlu0 %v678
        %v680 = vpop.xlane.xlu0 %679
        %vm681 = vcmp.eq.f32.partialorder %v678, %v680
        %v682 = vsel %vm681, %v677, inf
        %683 = vmin.xlane.f32.xlu0 %v682
        %v684 = vpop.xlane.xlu0 %683
        %v685 = vcvt.f32.s32 %v684
        %v686 = vcvt.f32.s32 %v680
        %v687 = vshll.u32 %v686, 16
        %v688 = vadd.s32 %v687, %v685
        %v689 = vsel %vm483, %v611, 2147483647
        %v690 = vand.u32 %v689, 65535
        %v691 = vshra.s32 %v689, 16
        %v692 = vcvt.s32.f32 %v690
        %v693 = vcvt.s32.f32 %v691
        %694 = vmin.xlane.f32.xlu0 %v693
        %v695 = vpop.xlane.xlu0 %694
        %vm696 = vcmp.eq.f32.partialorder %v693, %v695
        %v697 = vsel %vm696, %v692, inf
        %698 = vmin.xlane.f32.xlu0 %v697
        %v699 = vpop.xlane.xlu0 %698
        %v700 = vcvt.f32.s32 %v699
        %v701 = vcvt.f32.s32 %v695
        %v702 = vshll.u32 %v701, 16
        %v703 = vadd.s32 %v702, %v700
        %v704 = vsel %vm483, %v612, 2147483647
        %v705 = vand.u32 %v704, 65535
        %v706 = vshra.s32 %v704, 16
        %v707 = vcvt.s32.f32 %v705
        %v708 = vcvt.s32.f32 %v706
        %709 = vmin.xlane.f32.xlu0 %v708
        %v710 = vpop.xlane.xlu0 %709
        %vm711 = vcmp.eq.f32.partialorder %v708, %v710
        %v712 = vsel %vm711, %v707, inf
        %713 = vmin.xlane.f32.xlu0 %v712
        %v714 = vpop.xlane.xlu0 %713
        %v715 = vcvt.f32.s32 %v714
        %v716 = vcvt.f32.s32 %v710
        %v717 = vshll.u32 %v716, 16
        %v718 = vadd.s32 %v717, %v715
        %v719 = vsel %vm483, %v613, 2147483647
        %v720 = vand.u32 %v719, 65535
        %v721 = vshra.s32 %v719, 16
        %v722 = vcvt.s32.f32 %v720
        %v723 = vcvt.s32.f32 %v721
        %724 = vmin.xlane.f32.xlu0 %v723
        %v725 = vpop.xlane.xlu0 %724
        %vm726 = vcmp.eq.f32.partialorder %v723, %v725
        %v727 = vsel %vm726, %v722, inf
        %728 = vmin.xlane.f32.xlu0 %v727
        %v729 = vpop.xlane.xlu0 %728
        %v730 = vcvt.f32.s32 %v729
        %v731 = vcvt.f32.s32 %v725
        %v732 = vshll.u32 %v731, 16
        %v733 = vadd.s32 %v732, %v730
        %vm734 = vcmp.eq.s32.totalorder %v573, %v628
        %vm735 = vcmp.eq.s32.totalorder %v573, %v643
        %vm736 = vcmp.eq.s32.totalorder %v573, %v658
        %vm737 = vcmp.eq.s32.totalorder %v573, %v673
        %vm738 = vcmp.eq.s32.totalorder %v573, %v688
        %vm739 = vcmp.eq.s32.totalorder %v573, %v703
        %vm740 = vcmp.eq.s32.totalorder %v573, %v718
        %vm741 = vcmp.eq.s32.totalorder %v573, %v733
        %v742 = vsel %vm734, 1, 0
        %v743 = vsel %vm735, 1, 0
        %v744 = vsel %vm736, 1, 0
        %v745 = vsel %vm737, 1, 0
        %v746 = vsel %vm738, 1, 0
        %v747 = vsel %vm739, 1, 0
        %v748 = vsel %vm740, 1, 0
        %v749 = vsel %vm741, 1, 0
        %v750 = vcvt.s32.f32 %v742
        %v751 = vcvt.s32.f32 %v743
        %v752 = vcvt.s32.f32 %v744
        %v753 = vcvt.s32.f32 %v745
        %v754 = vcvt.s32.f32 %v746
        %v755 = vcvt.s32.f32 %v747
        %v756 = vcvt.s32.f32 %v748
        %v757 = vcvt.s32.f32 %v749
        %v758 = vld [vmem:[%s4] sm:$0xff]
        %v759 = vld [vmem:[%s4 + $0x8] sm:$0xff]
        %v760 = vld [vmem:[%s4 + $0x10] sm:$0xff]
        %v761 = vld [vmem:[%s4 + $0x18] sm:$0xff]
        %v762 = vld [vmem:[%s4 + $0x20] sm:$0xff]
        %v763 = vld [vmem:[%s4 + $0x28] sm:$0xff]
        %v764 = vld [vmem:[%s4 + $0x30] sm:$0xff]
        %v765 = vld [vmem:[%s4 + $0x38] sm:$0xff]
        %v767 = vsel %vm483, %v750, 0
        %v770 = vsel %vm483, %v751, 0
        %v773 = vsel %vm483, %v752, 0
        %v776 = vsel %vm483, %v753, 0
        %v779 = vsel %vm483, %v754, 0
        %v782 = vsel %vm483, %v755, 0
        %v785 = vsel %vm483, %v756, 0
        %v788 = vsel %vm483, %v757, 0
        %v791 = vsel %vm483, %v758, 0
        %v794 = vsel %vm483, %v759, 0
        %v797 = vsel %vm483, %v760, 0
        %v800 = vsel %vm483, %v761, 0
        %v803 = vsel %vm483, %v762, 0
        %v806 = vsel %vm483, %v763, 0
        %v809 = vsel %vm483, %v764, 0
        %v812 = vsel %vm483, %v765, 0
        %814 = vmatpush.xpose.msra.mxu0 0.0
        %815 = vmatpush.xpose.msra.mxu0 0.0
        %816 = vmatpush.xpose.msra.mxu0 0.0
        %817 = vmatpush.xpose.msra.mxu0 0.0
        %818 = vmatpush.xpose.msra.mxu0 0.0
        %819 = vmatpush.xpose.msra.mxu0 0.0
        %820 = vmatpush.xpose.msra.mxu0 0.0
        %821 = vmatpush.xpose.msra.mxu0 0.0
        %822 = vmatpush.xpose.msra.mxu0 %v812
        %823 = vmatpush.xpose.msra.mxu0 %v809
        %824 = vmatpush.xpose.msra.mxu0 %v806
        %825 = vmatpush.xpose.msra.mxu0 %v803
        %826 = vmatpush.xpose.msra.mxu0 %v800
        %827 = vmatpush.xpose.msra.mxu0 %v797
        %828 = vmatpush.xpose.msra.mxu0 %v794
        %829 = vmatpush.xpose.msra.mxu0 %v791
        %830 = vmatmul.f32.gmra.mxu0 %v767
        %v831 = vpop.f32.mrf.mxu0
        %v832 = vadd.f32 0.0, %v831
        %833 = vmatmul.f32.gmra.mxu0 %v770
        %v834 = vpop.f32.mrf.mxu0
        %v835 = vadd.f32 0.0, %v834
        %836 = vmatmul.f32.gmra.mxu0 %v773
        %v837 = vpop.f32.mrf.mxu0
        %v838 = vadd.f32 0.0, %v837
        %839 = vmatmul.f32.gmra.mxu0 %v776
        %v840 = vpop.f32.mrf.mxu0
        %v841 = vadd.f32 0.0, %v840
        %842 = vmatmul.f32.gmra.mxu0 %v779
        %v843 = vpop.f32.mrf.mxu0
        %v844 = vadd.f32 0.0, %v843
        %845 = vmatmul.f32.gmra.mxu0 %v782
        %v846 = vpop.f32.mrf.mxu0
        %v847 = vadd.f32 0.0, %v846
        %848 = vmatmul.f32.gmra.mxu0 %v785
        %v849 = vpop.f32.mrf.mxu0
        %v850 = vadd.f32 0.0, %v849
        %851 = vmatmul.f32.gmra.mxu0 %v788
        %v852 = vpop.f32.mrf.mxu0
        %v853 = vadd.f32 0.0, %v852
        %854 = vdwg.mxu0
        %855 = vst.msk [vmem:[%s353] sm:$0xff] %vm401, %v832
        %856 = vst.msk [vmem:[%s353 + $0x8] sm:$0xff] %vm401, %v835
        %857 = vst.msk [vmem:[%s353 + $0x10] sm:$0xff] %vm401, %v838
        %858 = vst.msk [vmem:[%s353 + $0x18] sm:$0xff] %vm401, %v841
        %859 = vst.msk [vmem:[%s353 + $0x20] sm:$0xff] %vm401, %v844
        %860 = vst.msk [vmem:[%s353 + $0x28] sm:$0xff] %vm401, %v847
        %861 = vst.msk [vmem:[%s353 + $0x30] sm:$0xff] %vm401, %v850
        %862 = vst.msk [vmem:[%s353 + $0x38] sm:$0xff] %vm401, %v853
        %v864 = vsel %vm401, %v832, 0
        %v867 = vsel %vm401, %v835, 0
        %v870 = vsel %vm401, %v838, 0
        %v873 = vsel %vm401, %v841, 0
        %v876 = vsel %vm401, %v844, 0
        %v879 = vsel %vm401, %v847, 0
        %v882 = vsel %vm401, %v850, 0
        %v885 = vsel %vm401, %v853, 0
        %887 = vmatpush.msra.mxu0 0.0
        %888 = vmatpush.msra.mxu0 0.0
        %889 = vmatpush.msra.mxu0 0.0
        %890 = vmatpush.msra.mxu0 0.0
        %891 = vmatpush.msra.mxu0 0.0
        %892 = vmatpush.msra.mxu0 0.0
        %893 = vmatpush.msra.mxu0 0.0
        %894 = vmatpush.msra.mxu0 0.0
        %895 = vmatpush.msra.mxu0 %v765
        %896 = vmatpush.msra.mxu0 %v764
        %897 = vmatpush.msra.mxu0 %v763
        %898 = vmatpush.msra.mxu0 %v762
        %899 = vmatpush.msra.mxu0 %v761
        %900 = vmatpush.msra.mxu0 %v760
        %901 = vmatpush.msra.mxu0 %v759
        %902 = vmatpush.msra.mxu0 %v758
        %903 = vmatmul.f32.gmra.mxu0 %v864
        %v904 = vpop.f32.mrf.mxu0
        %v905 = vadd.f32 0.0, %v904
        %906 = vmatmul.f32.gmra.mxu0 %v867
        %v907 = vpop.f32.mrf.mxu0
        %v908 = vadd.f32 0.0, %v907
        %909 = vmatmul.f32.gmra.mxu0 %v870
        %v910 = vpop.f32.mrf.mxu0
        %v911 = vadd.f32 0.0, %v910
        %912 = vmatmul.f32.gmra.mxu0 %v873
        %v913 = vpop.f32.mrf.mxu0
        %v914 = vadd.f32 0.0, %v913
        %915 = vmatmul.f32.gmra.mxu0 %v876
        %v916 = vpop.f32.mrf.mxu0
        %v917 = vadd.f32 0.0, %v916
        %918 = vmatmul.f32.gmra.mxu0 %v879
        %v919 = vpop.f32.mrf.mxu0
        %v920 = vadd.f32 0.0, %v919
        %921 = vmatmul.f32.gmra.mxu0 %v882
        %v922 = vpop.f32.mrf.mxu0
        %v923 = vadd.f32 0.0, %v922
        %924 = vmatmul.f32.gmra.mxu0 %v885
        %v925 = vpop.f32.mrf.mxu0
        %v926 = vadd.f32 0.0, %v925
        %927 = vdwg.mxu0
        %v928 = vsel %vm483, %v444, -inf
        %929 = vmax.xlane.f32.xlu0 %v928
        %v930 = vpop.xlane.xlu0 %929
        %v931 = vsel %vm483, %v447, -inf
        %932 = vmax.xlane.f32.xlu0 %v931
        %v933 = vpop.xlane.xlu0 %932
        %v934 = vsel %vm483, %v450, -inf
        %935 = vmax.xlane.f32.xlu0 %v934
        %v936 = vpop.xlane.xlu0 %935
        %v937 = vsel %vm483, %v453, -inf
        %938 = vmax.xlane.f32.xlu0 %v937
        %v939 = vpop.xlane.xlu0 %938
        %v940 = vsel %vm483, %v456, -inf
        %941 = vmax.xlane.f32.xlu0 %v940
        %v942 = vpop.xlane.xlu0 %941
        %v943 = vsel %vm483, %v459, -inf
        %944 = vmax.xlane.f32.xlu0 %v943
        %v945 = vpop.xlane.xlu0 %944
        %v946 = vsel %vm483, %v462, -inf
        %947 = vmax.xlane.f32.xlu0 %v946
        %v948 = vpop.xlane.xlu0 %947
        %v949 = vsel %vm483, %v465, -inf
        %950 = vmax.xlane.f32.xlu0 %v949
        %v951 = vpop.xlane.xlu0 %950
        %v952 = vsub.f32 %v444, %v930
        %v953 = vsub.f32 %v447, %v933
        %v954 = vsub.f32 %v450, %v936
        %v955 = vsub.f32 %v453, %v939
        %v956 = vsub.f32 %v456, %v942
        %v957 = vsub.f32 %v459, %v945
        %v958 = vsub.f32 %v462, %v948
        %v959 = vsub.f32 %v465, %v951
        %v960 = vmul.f32 %v952, 1.442695
        %v961 = vpow.pop %v960
        %v962 = vmul.f32 %v953, 1.442695
        %v963 = vpow.pop %v962
        %v964 = vmul.f32 %v954, 1.442695
        %v965 = vpow.pop %v964
        %v966 = vmul.f32 %v955, 1.442695
        %v967 = vpow.pop %v966
        %v968 = vmul.f32 %v956, 1.442695
        %v969 = vpow.pop %v968
        %v970 = vmul.f32 %v957, 1.442695
        %v971 = vpow.pop %v970
        %v972 = vmul.f32 %v958, 1.442695
        %v973 = vpow.pop %v972
        %v974 = vmul.f32 %v959, 1.442695
        %v975 = vpow.pop %v974
        %v976 = vsel %vm483, %v961, 0.0
        %977 = vadd.xlane.f32.xlu0 %v976
        %v978 = vpop.xlane.xlu0 %977
        %v979 = vsel %vm483, %v963, 0.0
        %980 = vadd.xlane.f32.xlu0 %v979
        %v981 = vpop.xlane.xlu0 %980
        %v982 = vsel %vm483, %v965, 0.0
        %983 = vadd.xlane.f32.xlu0 %v982
        %v984 = vpop.xlane.xlu0 %983
        %v985 = vsel %vm483, %v967, 0.0
        %986 = vadd.xlane.f32.xlu0 %v985
        %v987 = vpop.xlane.xlu0 %986
        %v988 = vsel %vm483, %v969, 0.0
        %989 = vadd.xlane.f32.xlu0 %v988
        %v990 = vpop.xlane.xlu0 %989
        %v991 = vsel %vm483, %v971, 0.0
        %992 = vadd.xlane.f32.xlu0 %v991
        %v993 = vpop.xlane.xlu0 %992
        %v994 = vsel %vm483, %v973, 0.0
        %995 = vadd.xlane.f32.xlu0 %v994
        %v996 = vpop.xlane.xlu0 %995
        %v997 = vsel %vm483, %v975, 0.0
        %998 = vadd.xlane.f32.xlu0 %v997
        %v999 = vpop.xlane.xlu0 %998
        %v1000 = vrcp.pop %v978
        %v1001 = vrcp.pop %v981
        %v1002 = vrcp.pop %v984
        %v1003 = vrcp.pop %v987
        %v1004 = vrcp.pop %v990
        %v1005 = vrcp.pop %v993
        %v1006 = vrcp.pop %v996
        %v1007 = vrcp.pop %v999
        %v1008 = vmul.f32 %v961, %v1000
        %v1009 = vmul.f32 %v963, %v1001
        %v1010 = vmul.f32 %v965, %v1002
        %v1011 = vmul.f32 %v967, %v1003
        %v1012 = vmul.f32 %v969, %v1004
        %v1013 = vmul.f32 %v971, %v1005
        %v1014 = vmul.f32 %v973, %v1006
        %v1015 = vmul.f32 %v975, %v1007
        %v1016 = vmul.f32 %v1008, 64.0
        %v1017 = vmul.f32 %v1009, 64.0
        %v1018 = vmul.f32 %v1010, 64.0
        %v1019 = vmul.f32 %v1011, 64.0
        %v1020 = vmul.f32 %v1012, 64.0
        %v1021 = vmul.f32 %v1013, 64.0
        %v1022 = vmul.f32 %v1014, 64.0
        %v1023 = vmul.f32 %v1015, 64.0
        %v1024 = vadd.f32 %v1016, 1e-12
        %v1025 = vadd.f32 %v1017, 1e-12
        %v1026 = vadd.f32 %v1018, 1e-12
        %v1027 = vadd.f32 %v1019, 1e-12
        %v1028 = vadd.f32 %v1020, 1e-12
        %v1029 = vadd.f32 %v1021, 1e-12
        %v1030 = vadd.f32 %v1022, 1e-12
        %v1031 = vadd.f32 %v1023, 1e-12
        %v1032 = vlog2.pop %v1024
        %v1033 = vmul.f32 %v1032, 0.6931472
        %v1034 = vlog2.pop %v1025
        %v1035 = vmul.f32 %v1034, 0.6931472
        %v1036 = vlog2.pop %v1026
        %v1037 = vmul.f32 %v1036, 0.6931472
        %v1038 = vlog2.pop %v1027
        %v1039 = vmul.f32 %v1038, 0.6931472
        %v1040 = vlog2.pop %v1028
        %v1041 = vmul.f32 %v1040, 0.6931472
        %v1042 = vlog2.pop %v1029
        %v1043 = vmul.f32 %v1042, 0.6931472
        %v1044 = vlog2.pop %v1030
        %v1045 = vmul.f32 %v1044, 0.6931472
        %v1046 = vlog2.pop %v1031
        %v1047 = vmul.f32 %v1046, 0.6931472
        %v1048 = vmul.f32 %v1008, %v1033
        %v1049 = vmul.f32 %v1009, %v1035
        %v1050 = vmul.f32 %v1010, %v1037
        %v1051 = vmul.f32 %v1011, %v1039
        %v1052 = vmul.f32 %v1012, %v1041
        %v1053 = vmul.f32 %v1013, %v1043
        %v1054 = vmul.f32 %v1014, %v1045
        %v1055 = vmul.f32 %v1015, %v1047
        %v1056 = vsel %vm483, %v1048, 0.0
        %1057 = vadd.xlane.f32.xlu0 %v1056
        %v1058 = vpop.xlane.xlu0 %1057
        %v1059 = vsel %vm483, %v1049, 0.0
        %1060 = vadd.xlane.f32.xlu0 %v1059
        %v1061 = vpop.xlane.xlu0 %1060
        %v1062 = vsel %vm483, %v1050, 0.0
        %1063 = vadd.xlane.f32.xlu0 %v1062
        %v1064 = vpop.xlane.xlu0 %1063
        %v1065 = vsel %vm483, %v1051, 0.0
        %1066 = vadd.xlane.f32.xlu0 %v1065
        %v1067 = vpop.xlane.xlu0 %1066
        %v1068 = vsel %vm483, %v1052, 0.0
        %1069 = vadd.xlane.f32.xlu0 %v1068
        %v1070 = vpop.xlane.xlu0 %1069
        %v1071 = vsel %vm483, %v1053, 0.0
        %1072 = vadd.xlane.f32.xlu0 %v1071
        %v1073 = vpop.xlane.xlu0 %1072
        %v1074 = vsel %vm483, %v1054, 0.0
        %1075 = vadd.xlane.f32.xlu0 %v1074
        %v1076 = vpop.xlane.xlu0 %1075
        %v1077 = vsel %vm483, %v1055, 0.0
        %1078 = vadd.xlane.f32.xlu0 %v1077
        %v1079 = vpop.xlane.xlu0 %1078
        %v1080 = vmul.f32 %v1058, 0.0005
        %v1081 = vmul.f32 %v1061, 0.0005
        %v1082 = vmul.f32 %v1064, 0.0005
        %v1083 = vmul.f32 %v1067, 0.0005
        %v1084 = vmul.f32 %v1070, 0.0005
        %v1085 = vmul.f32 %v1073, 0.0005
        %v1086 = vmul.f32 %v1076, 0.0005
        %v1087 = vmul.f32 %v1079, 0.0005
        %vm1088 = vcmask 7168
        %1089 = vst.msk [vmem:[%s379] sm:$0xff] %vm1088, %v1080
        %1090 = vst.msk [vmem:[%s379 + $0x8] sm:$0xff] %vm1088, %v1081
        %1091 = vst.msk [vmem:[%s379 + $0x10] sm:$0xff] %vm1088, %v1082
        %1092 = vst.msk [vmem:[%s379 + $0x18] sm:$0xff] %vm1088, %v1083
        %1093 = vst.msk [vmem:[%s379 + $0x20] sm:$0xff] %vm1088, %v1084
        %1094 = vst.msk [vmem:[%s379 + $0x28] sm:$0xff] %vm1088, %v1085
        %1095 = vst.msk [vmem:[%s379 + $0x30] sm:$0xff] %vm1088, %v1086
        %1096 = vst.msk [vmem:[%s379 + $0x38] sm:$0xff] %vm1088, %v1087
        %v1097 = vld [vmem:[%s5] sm:$0xff]
        %v1098 = vld [vmem:[%s5 + $0x8] sm:$0xff]
        %v1099 = vld [vmem:[%s6] sm:$0x1]
        %v1101 = vperm.slane %v1099, 0
        %v1104 = vsel %vm483, %v905, 0
        %v1107 = vsel %vm483, %v908, 0
        %v1110 = vsel %vm483, %v911, 0
        %v1113 = vsel %vm483, %v914, 0
        %v1116 = vsel %vm483, %v917, 0
        %v1119 = vsel %vm483, %v920, 0
        %v1122 = vsel %vm483, %v923, 0
        %v1125 = vsel %vm483, %v926, 0
        %1127 = vmatpush.msra.mxu0 0.0
        %1128 = vmatpush.msra.mxu0 0.0
        %1129 = vmatpush.msra.mxu0 0.0
        %1130 = vmatpush.msra.mxu0 0.0
        %1131 = vmatpush.msra.mxu0 0.0
        %1132 = vmatpush.msra.mxu0 0.0
        %1133 = vmatpush.msra.mxu0 0.0
        %1134 = vmatpush.msra.mxu0 0.0
        %1135 = vmatpush.msra.mxu0 0.0
        %1136 = vmatpush.msra.mxu0 0.0
        %1137 = vmatpush.msra.mxu0 0.0
        %1138 = vmatpush.msra.mxu0 0.0
        %1139 = vmatpush.msra.mxu0 0.0
        %1140 = vmatpush.msra.mxu0 0.0
        %1141 = vmatpush.msra.mxu0 %v1098
        %1142 = vmatpush.msra.mxu0 %v1097
        %1143 = vmatmul.f32.gmra.mxu0 %v1104
        %v1144 = vpop.f32.mrf.mxu0
        %v1145 = vadd.f32 %v1101, %v1144
        %1146 = vmatmul.f32.gmra.mxu0 %v1107
        %v1147 = vpop.f32.mrf.mxu0
        %v1148 = vadd.f32 %v1101, %v1147
        %1149 = vmatmul.f32.gmra.mxu0 %v1110
        %v1150 = vpop.f32.mrf.mxu0
        %v1151 = vadd.f32 %v1101, %v1150
        %1152 = vmatmul.f32.gmra.mxu0 %v1113
        %v1153 = vpop.f32.mrf.mxu0
        %v1154 = vadd.f32 %v1101, %v1153
        %1155 = vmatmul.f32.gmra.mxu0 %v1116
        %v1156 = vpop.f32.mrf.mxu0
        %v1157 = vadd.f32 %v1101, %v1156
        %1158 = vmatmul.f32.gmra.mxu0 %v1119
        %v1159 = vpop.f32.mrf.mxu0
        %v1160 = vadd.f32 %v1101, %v1159
        %1161 = vmatmul.f32.gmra.mxu0 %v1122
        %v1162 = vpop.f32.mrf.mxu0
        %v1163 = vadd.f32 %v1101, %v1162
        %1164 = vmatmul.f32.gmra.mxu0 %v1125
        %v1165 = vpop.f32.mrf.mxu0
        %v1166 = vadd.f32 %v1101, %v1165
        %1167 = vdwg.mxu0
        %1168 = vst.msk [vmem:[%s346] sm:$0xff] %vm401, %v1145
        %1169 = vst.msk [vmem:[%s346 + $0x8] sm:$0xff] %vm401, %v1148
        %1170 = vst.msk [vmem:[%s346 + $0x10] sm:$0xff] %vm401, %v1151
        %1171 = vst.msk [vmem:[%s346 + $0x18] sm:$0xff] %vm401, %v1154
        %1172 = vst.msk [vmem:[%s346 + $0x20] sm:$0xff] %vm401, %v1157
        %1173 = vst.msk [vmem:[%s346 + $0x28] sm:$0xff] %vm401, %v1160
        %1174 = vst.msk [vmem:[%s346 + $0x30] sm:$0xff] %vm401, %v1163
        %1175 = vst.msk [vmem:[%s346 + $0x38] sm:$0xff] %vm401, %v1166
        %s1176 = sand.u32 %s192, 1
        %s1177 = scalar_lea.sflag [#allocation3], %s1176
        %s1178 = sand.u32 %s192, 1
        %s1179 = smul.addr %s1178, 64
        %s1180 = scalar_lea.vmem [#allocation2], %s1179
        %s1181 = sand.u32 %s218, 1
        %s1182 = scalar_lea.sflag [#allocation5], %s1181
        %s1183 = sand.u32 %s218, 1
        %s1184 = smul.addr %s1183, 64
        %s1185 = scalar_lea.vmem [#allocation4], %s1184
        %s1186 = smul.u32 8, %s27
        %p1187 = scmp.lt.s32.totalorder %s1186, 15
        %s1188 = scalar_select %p1187, %s1186, 15
        %s1189 = smul.addr %s1188, 8
        %s1190 = scalar_lea.vmem %s9, %s1189
        // Predicated region
        $region49: #{gumbel_quantiser_forward.1} parent=47 // pred_check
          %p1191 = pneg %p202
        $region50: #{gumbel_quantiser_forward.1} parent=47 // pred_check_branch
          %1193 = sbr.rel (%p1191) target = $region52
        $region51: #{gumbel_quantiser_forward.1} parent=47 // pred_region
          %s1194 = smul.u32 8, %s27
          %1196 = vsyncadd %s1177, 0
          %s1197 = smul.addr %s1194, 8
          %s1198 = scalar_lea.hbm %s7, %s1197
          %s1199 = sshll.u32 %s1180, 4
          %s1200 = int_to_ptr.vmem [resolvable:$true] %s1199
          %s1201 = sshll.u32 %s1198, 4
          %s1202 = int_to_ptr.hbm [resolvable:$true] %s1201
          %1207 = dma.vmem_to_hbm [thread:$0]  %s1200, 1024, %s1202, %s1177, 128, 128, 8
        $region52: #{gumbel_quantiser_forward.1} parent=47 // pred_fallthru
          _
        // Predicated region
        $region53: #{gumbel_quantiser_forward.1} parent=47 // pred_check
          %p1208 = pneg %p228
        $region54: #{gumbel_quantiser_forward.1} parent=47 // pred_check_branch
          %1210 = sbr.rel (%p1208) target = $region56
        $region55: #{gumbel_quantiser_forward.1} parent=47 // pred_region
          %s1211 = smul.u32 8, %s27
          %1213 = vsyncadd %s1182, 0
          %s1214 = smul.addr %s1211, 8
          %s1215 = scalar_lea.hbm %s8, %s1214
          %s1216 = sshll.u32 %s1185, 4
          %s1217 = int_to_ptr.vmem [resolvable:$true] %s1216
          %s1218 = sshll.u32 %s1215, 4
          %s1219 = int_to_ptr.hbm [resolvable:$true] %s1218
          %1224 = dma.vmem_to_hbm [thread:$0]  %s1217, 1024, %s1219, %s1182, 128, 128, 8
        $region56: #{gumbel_quantiser_forward.1} parent=47 // pred_fallthru
          _
        // Predicated region
        $region57: #{gumbel_quantiser_forward.1} parent=47 // pred_check
          %p1225 = pneg %p254
        $region58: #{gumbel_quantiser_forward.1} parent=47 // pred_check_branch
          %1227 = sbr.rel (%p1225) target = $region60
        $region59: #{gumbel_quantiser_forward.1} parent=47 // pred_region
          %s1228 = smul.u32 8, %s27
        $region60: #{gumbel_quantiser_forward.1} parent=47 // pred_fallthru
          _
      $region48: #{gumbel_quantiser_forward.1} parent=5 // pred_fallthru
        _
      %p1229 = scmp.le.s32.totalorder 2, %s22
      // Predicated region
      $region61: #{gumbel_quantiser_forward.1} parent=5 // pred_check
        %p1230 = pneg %p1229
      $region62: #{gumbel_quantiser_forward.1} parent=5 // pred_check_branch
        %1232 = sbr.rel (%p1230) target = $region64
      $region63: #{gumbel_quantiser_forward.1} parent=5 // pred_region
        %s1233 = ssub.s32 %s22, 2
        // Predicated region
        $region65: #{gumbel_quantiser_forward.1} parent=63 // pred_check
          %p1234 = pneg %p208
        $region66: #{gumbel_quantiser_forward.1} parent=63 // pred_check_branch
          %1236 = sbr.rel (%p1234) target = $region68
        $region67: #{gumbel_quantiser_forward.1} parent=63 // pred_region
          %s1237 = sand.u32 %s193, 1
          %s1238 = scalar_lea.sflag [#allocation3], %s1237
          %s1239 = sand.u32 %s193, 1
          %s1240 = smul.addr %s1239, 64
          %s1241 = scalar_lea.vmem [#allocation2], %s1240
          %1243 = dma.done %s1238, 1024
        $region68: #{gumbel_quantiser_forward.1} parent=63 // pred_fallthru
          _
        // Predicated region
        $region69: #{gumbel_quantiser_forward.1} parent=63 // pred_check
          %p1244 = pneg %p234
        $region70: #{gumbel_quantiser_forward.1} parent=63 // pred_check_branch
          %1246 = sbr.rel (%p1244) target = $region72
        $region71: #{gumbel_quantiser_forward.1} parent=63 // pred_region
          %s1247 = sand.u32 %s219, 1
          %s1248 = scalar_lea.sflag [#allocation5], %s1247
          %s1249 = sand.u32 %s219, 1
          %s1250 = smul.addr %s1249, 64
          %s1251 = scalar_lea.vmem [#allocation4], %s1250
          %1253 = dma.done %s1248, 1024
        $region72: #{gumbel_quantiser_forward.1} parent=63 // pred_fallthru
          _
        // Predicated region
        $region73: #{gumbel_quantiser_forward.1} parent=63 // pred_check
          %p1254 = pneg %p260
        $region74: #{gumbel_quantiser_forward.1} parent=63 // pred_check_branch
          %1256 = sbr.rel (%p1254) target = $region76
        $region75: #{gumbel_quantiser_forward.1} parent=63 // pred_region
          %s1257 = smul.u32 8, %s28
          %p1258 = scmp.lt.s32.totalorder %s1257, 15
          %s1259 = scalar_select %p1258, %s1257, 15
          %s1260 = smul.addr %s1259, 8
          %s1261 = scalar_lea.vmem %s9, %s1260
        $region76: #{gumbel_quantiser_forward.1} parent=63 // pred_fallthru
          _
      $region64: #{gumbel_quantiser_forward.1} parent=5 // pred_fallthru
        _
    $region6: #{gumbel_quantiser_forward.1} parent=1 // loop_footer
      %s26 = sadd.s32 1, %s22
    $region7: #{gumbel_quantiser_forward.1} parent=1 // loop_footer_branch
      %21 = sbr.rel target = $region3
    $region8: #{gumbel_quantiser_forward.1} parent=1 // loop_exit
      _
    %1262 = vsyncpa [#allocation3], 1
    %s1263 = scalar_lea.sflag [#allocation3], 1
    %1264 = vsyncpa %s1263, 1
    %1265 = vsyncpa [#allocation5], 1
    %s1266 = scalar_lea.sflag [#allocation5], 1
    %1267 = vsyncpa %s1266, 1

</llo_original>
